<compile_context>
chip_gen: v7x
topology: tpu7x:2x2x1
jax: 0.10.0
libtpu: 0.0.40
codegen_flags: <defaults>
</compile_context>

<pallas_src>
import functools
from typing import NamedTuple

import jax
import jax.numpy as jnp
from jax.experimental import pallas as pl
from jax.experimental.pallas import tpu as pltpu

LANE = 128      # vreg lane width
SUBLANE = 8     # vreg sublane count (f32)
MXU_WIDE = 256  # v6e/v7x MXU tile width


def _round_up(x, m):
    return (x + m - 1) // m * m


def _round_feature(d):
    # Lane-dense padding.  Dims already >= 256 round up to the v6e/v7x MXU width
    # (256) so N/K passes fill the 256x256 array; smaller dims round to 128 lanes
    # (perfect for v5e's 128x128 MXU, and avoids inflating FLOPs for tiny dims).
    return _round_up(d, MXU_WIDE) if d >= MXU_WIDE else _round_up(d, LANE)


def _pad2(a, rows, cols):
    return jnp.pad(a, ((0, rows - a.shape[0]), (0, cols - a.shape[1])))


class MLPParams(NamedTuple):
    w1: jax.Array
    b1: jax.Array
    w2: jax.Array
    b2: jax.Array
    w3: jax.Array
    b3: jax.Array


# ----------------------------------------------------------------------------
# Kernel
# ----------------------------------------------------------------------------
def mlp_kernel(x_ref, w1_ref, b1_ref, w2_ref, b2_ref, w3_ref, b3_ref, o_ref):
    # One batch tile: three MXU matmuls (f32 accumulate) + elementwise epilogues,
    # fully VMEM resident.
    cdt = w2_ref.dtype
    relu_in_cdt = cdt != jnp.float32   # bf16 ReLU on the bf16-MXU path

    def relu(h):
        if relu_in_cdt:
            # Cast first, then ReLU in the MXU operand dtype: halves VALU work and
            # live vreg footprint for h1/h2 (free on v6e/v7x bf16 VPU).
            return jnp.maximum(h.astype(cdt), 0)
        return jnp.maximum(h, 0.0)

    x = x_ref[...]
    h1 = jnp.dot(x, w1_ref[...], preferred_element_type=jnp.float32) + b1_ref[...]
    h1 = relu(h1)
    h2 = jnp.dot(h1, w2_ref[...], preferred_element_type=jnp.float32) + b2_ref[...]
    h2 = relu(h2)
    z = jnp.dot(h2, w3_ref[...], preferred_element_type=jnp.float32) + b3_ref[...]
    o_ref[...] = jax.nn.sigmoid(z).astype(o_ref.dtype)   # exp on EUP, no VPU divide


# ----------------------------------------------------------------------------
# One-time weight preparation (hoisted out of the per-call path)
# ----------------------------------------------------------------------------
def prepare_params(w1, b1, w2, b2, w3, b3, *, compute_dtype=jnp.bfloat16):
    """Pad feature dims to MXU/lane-friendly sizes and cast MXU operands ONCE.

    Zero padding keeps the math identical; biases stay f32 (they add onto the f32
    accumulator).  Do this once per model, not per forward call.
    """
    cdt = jnp.dtype(compute_dtype)
    din, h = w1.shape
    dout = w3.shape[1]
    din_p, h_p, dout_p = _round_feature(din), _round_feature(h), _round_feature(dout)

    b1 = jnp.reshape(b1, (1, -1))
    b2 = jnp.reshape(b2, (1, -1))
    b3 = jnp.reshape(b3, (1, -1))

    return MLPParams(
        w1=_pad2(w1, din_p, h_p).astype(cdt),
        b1=_pad2(b1, 1, h_p).astype(jnp.float32),
        w2=_pad2(w2, h_p, h_p).astype(cdt),
        b2=_pad2(b2, 1, h_p).astype(jnp.float32),
        w3=_pad2(w3, h_p, dout_p).astype(cdt),
        b3=_pad2(b3, 1, dout_p).astype(jnp.float32),
    )


# ----------------------------------------------------------------------------
# Buffered(1) capability probe (weights need only a single VMEM buffer since
# their index_map is constant; halving their residency matters on v7x's 64 MiB).
# ----------------------------------------------------------------------------
_SINGLE_BUFFER_WEIGHTS = None


def _single_buffer_weights_supported():
    global _SINGLE_BUFFER_WEIGHTS
    if _SINGLE_BUFFER_WEIGHTS is None:
        def _copy(x_ref, o_ref):
            o_ref[...] = x_ref[...]
        try:
            spec = pl.BlockSpec((8, 128), lambda i: (0, 0),
                                pipeline_mode=pl.Buffered(1))
            probe = pl.pallas_call(
                _copy,
                out_shape=jax.ShapeDtypeStruct((8, 128), jnp.float32),
                grid=(1,),
                in_specs=[spec],
                out_specs=pl.BlockSpec((8, 128), lambda i: (0, 0)),
            )
            jax.block_until_ready(probe(jnp.zeros((8, 128), jnp.float32)))
            _SINGLE_BUFFER_WEIGHTS = True
        except Exception:
            _SINGLE_BUFFER_WEIGHTS = False
    return _SINGLE_BUFFER_WEIGHTS


def _const_spec(shape, single_buffer):
    idx_map = lambda i: (0,) * len(shape)
    if single_buffer:
        return pl.BlockSpec(shape, idx_map, pipeline_mode=pl.Buffered(1))
    return pl.BlockSpec(shape, idx_map)


# ----------------------------------------------------------------------------
# Forward
# ----------------------------------------------------------------------------
@functools.partial(
    jax.jit,
    static_argnames=("out_dim", "block_rows", "out_dtype", "single_buffer_weights"))
def _mlp_forward_impl(x, params, *, out_dim, block_rows, out_dtype,
                      single_buffer_weights):
    w1p, b1p, w2p, b2p, w3p, b3p = params
    B, din = x.shape
    din_p, h_p = w1p.shape
    dout_p = w3p.shape[1]
    cdt = w1p.dtype
    odt = jnp.dtype(out_dtype)

    # Batch tile: multiple of 8 sublanes, capped at block_rows; prefer >= 2 batch
    # tiles when B allows so the "parallel" axis can shard across v7x's 2 TCs.
    tm_cap = _round_up(block_rows, SUBLANE)
    half = _round_up(-(-B // 2), SUBLANE)
    TM = max(SUBLANE, min(_round_up(B, SUBLANE), tm_cap, half))
    B_p = _round_up(B, TM)
    grid = (B_p // TM,)

    # Per-call activation prep only (weights were prepared once).
    xp = _pad2(x, B_p, din_p).astype(cdt)

    # VMEM budget from actual residency (+50% headroom), clamped to the smallest
    # per-core physical VMEM across generations (64 MiB on v7x).
    w_factor = 1 if single_buffer_weights else 2
    w_bytes = (w1p.size + w2p.size + w3p.size) * cdt.itemsize
    b_bytes = (b1p.size + b2p.size + b3p.size) * b1p.dtype.itemsize
    io_bytes = 2 * TM * din_p * cdt.itemsize + 2 * TM * dout_p * odt.itemsize
    tmp_bytes = 3 * TM * h_p * 4                      # h1/h2/accumulator temporaries
    needed = w_factor * (w_bytes + b_bytes) + io_bytes + tmp_bytes
    vmem_limit = int(min(max(int(needed * 1.5) + (4 << 20), 32 << 20), 64 << 20))

    flops = 2 * B_p * (din_p * h_p + h_p * h_p + h_p * dout_p)
    bytes_accessed = int(
        xp.size * xp.dtype.itemsize + w_bytes + b_bytes + B_p * dout_p * odt.itemsize)
    cost = pl.CostEstimate(flops=int(flops), transcendentals=int(B_p * dout_p),
                           bytes_accessed=bytes_accessed)

    # x / out tile over the batch grid axis; weights & biases use constant
    # index_maps (DMA'd once, pinned in VMEM across all batch tiles) and are
    # single-buffered when the Buffered(1) pipeline mode is available.
    out_p = pl.pallas_call(
        mlp_kernel,
        out_shape=jax.ShapeDtypeStruct((B_p, dout_p), odt),
        grid=grid,
        in_specs=[
            pl.BlockSpec((TM, din_p), lambda i: (i, 0)),
            _const_spec((din_p, h_p), single_buffer_weights),
            _const_spec((1, h_p), single_buffer_weights),
            _const_spec((h_p, h_p), single_buffer_weights),
            _const_spec((1, h_p), single_buffer_weights),
            _const_spec((h_p, dout_p), single_buffer_weights),
            _const_spec((1, dout_p), single_buffer_weights),
        ],
        out_specs=pl.BlockSpec((TM, dout_p), lambda i: (i, 0)),
        compiler_params=pltpu.CompilerParams(
            dimension_semantics=("parallel",),      # megacore-shardable batch axis
            vmem_limit_bytes=vmem_limit),
        cost_estimate=cost,
    )(xp, w1p, b1p, w2p, b2p, w3p, b3p)

    # Slice zero-padded rows/lanes back off (padded output lanes hold sigmoid(0)=0.5,
    # so never reuse the padded buffer downstream).
    return out_p[:B, :out_dim]
    # TODO(synk): switch to a K-tiled grid axis with a VMEM f32 accumulator
    # (pl.when init/finalize) once resident weights in the compute dtype exceed
    # ~40 MiB on v7x (H >~ 2.5-3k in bf16) or ~96 MiB on v5e/v6e, instead of full
    # weight residency.


def mlp_forward(x, params, *, out_dim, block_rows=512, out_dtype=jnp.float32):
    """Fused MLP forward.  `params` must come from prepare_params()."""
    return _mlp_forward_impl(
        x, params, out_dim=out_dim, block_rows=block_rows, out_dtype=out_dtype,
        single_buffer_weights=_single_buffer_weights_supported())


# ----------------------------------------------------------------------------
# Test harness
# ----------------------------------------------------------------------------
def init_params(key, input_dim, hidden_dim, output_dim):
    # Deterministic synthetic init (PyTorch-style uniform bounds), not a checkpoint load.
    ks = jax.random.split(key, 6)

    def linear(kw, kb, fan_in, fan_out):
        bound = 1.0 / jnp.sqrt(fan_in)
        w = jax.random.uniform(kw, (fan_in, fan_out), jnp.float32, -bound, bound)
        b = jax.random.uniform(kb, (1, fan_out), jnp.float32, -bound, bound)
        return w, b

    w1, b1 = linear(ks[0], ks[1], input_dim, hidden_dim)
    w2, b2 = linear(ks[2], ks[3], hidden_dim, hidden_dim)
    w3, b3 = linear(ks[4], ks[5], hidden_dim, output_dim)
    return w1, b1, w2, b2, w3, b3


def _reference(x, w1, b1, w2, b2, w3, b3):
    h1 = jnp.maximum(x @ w1 + b1, 0.0)
    h2 = jnp.maximum(h1 @ w2 + b2, 0.0)
    return jax.nn.sigmoid(h2 @ w3 + b3)


if __name__ == "__main__":
    input_dim, hidden_dim, output_dim = 16, 32, 8
    batch = 8

    key = jax.random.PRNGKey(0)
    kx, kp = jax.random.split(key)
    x = jax.random.normal(kx, (batch, input_dim), jnp.float32)
    raw = init_params(kp, input_dim, hidden_dim, output_dim)
    ref = _reference(x, *raw)

    # Default fast path: bf16 MXU operands, f32 accumulation.
    params_bf16 = prepare_params(*raw)                       # compute_dtype=bf16
    out = mlp_forward(x, params_bf16, out_dim=output_dim)
    jax.block_until_ready(out)
    assert out.shape == (batch, output_dim)
    assert jnp.allclose(out, ref, atol=3e-2, rtol=3e-2)

    # Strict-accuracy opt-in path: f32 MXU operands (exact PyTorch semantics).
    params_f32 = prepare_params(*raw, compute_dtype=jnp.float32)
    out_f32 = mlp_forward(x, params_f32, out_dim=output_dim)
    jax.block_until_ready(out_f32)
    assert jnp.allclose(out_f32, ref, atol=1e-5, rtol=1e-5)

    # Multi-tile grid path: larger, non-aligned batch exercises batch tiling,
    # padding, >=2 "parallel" tiles, and the bf16-output option.
    x_big = jax.random.normal(jax.random.PRNGKey(7), (300, input_dim), jnp.float32)
    out_big = mlp_forward(x_big, params_bf16, out_dim=output_dim,
                          block_rows=128, out_dtype=jnp.bfloat16)
    jax.block_until_ready(out_big)
    assert out_big.shape == (300, output_dim)
    assert jnp.allclose(out_big.astype(jnp.float32), _reference(x_big, *raw),
                        atol=5e-2, rtol=5e-2)

    print("KERNEL_OK")
</pallas_src>

<mosaic_0001>
module attributes {stable_mosaic.version = 11 : i64} {
  func.func @_copy(%arg0: i32, %arg1: memref<8x128xf32, #tpu.memory_space<vmem>>, %arg2: memref<8x128xf32, #tpu.memory_space<vmem>>) attributes {dimension_semantics = [#tpu.dimension_semantics<arbitrary>], iteration_bounds = array<i64: 1>, scalar_prefetch = 0 : i64, scratch_operands = 0 : i64, tpu.core_type = #tpu.core_type<tc>, window_params = [{pipeline_mode = #tpu.pipeline_mode<synchronous>, transform_indices = @transform_0, window_bounds = array<i64: 8, 128>}, {pipeline_mode = #tpu.pipeline_mode<synchronous>, transform_indices = @transform_1, window_bounds = array<i64: 8, 128>}]} {
    %c0 = arith.constant 0 : index
    %c0_0 = arith.constant 0 : index
    %0 = vector.load %arg1[%c0, %c0_0] : memref<8x128xf32, #tpu.memory_space<vmem>>, vector<8x128xf32>
    %c0_1 = arith.constant 0 : index
    %c0_2 = arith.constant 0 : index
    %1 = vector.load %arg2[%c0_1, %c0_2] : memref<8x128xf32, #tpu.memory_space<vmem>>, vector<8x128xf32>
    tpu.vector_store %arg2[%c0_1, %c0_2], %0 {strides = array<i32>} : memref<8x128xf32, #tpu.memory_space<vmem>>, vector<8x128xf32>,
    return
  }
  func.func @transform_0(%arg0: i32) -> (i32, i32) {
    %c0_i32 = arith.constant 0 : i32
    %c0_i32_0 = arith.constant 0 : i32
    %c0_i32_1 = arith.constant 0 : i32
    return %c0_i32, %c0_i32_0 : i32, i32
  }
  func.func @transform_1(%arg0: i32) -> (i32, i32) {
    %c0_i32 = arith.constant 0 : i32
    %c0_i32_0 = arith.constant 0 : i32
    %c0_i32_1 = arith.constant 0 : i32
    return %c0_i32, %c0_i32_0 : i32, i32
  }
}

module attributes {stable_mosaic.version = 11 : i64} {
  func.func @mlp_kernel(%arg0: i32, %arg1: memref<8x128xbf16, #tpu.memory_space<vmem>>, %arg2: memref<128x128xbf16, #tpu.memory_space<vmem>>, %arg3: memref<1x128xf32, #tpu.memory_space<vmem>>, %arg4: memref<128x128xbf16, #tpu.memory_space<vmem>>, %arg5: memref<1x128xf32, #tpu.memory_space<vmem>>, %arg6: memref<128x128xbf16, #tpu.memory_space<vmem>>, %arg7: memref<1x128xf32, #tpu.memory_space<vmem>>, %arg8: memref<8x128xf32, #tpu.memory_space<vmem>>) attributes {dimension_semantics = [#tpu.dimension_semantics<parallel>], iteration_bounds = array<i64: 1>, scalar_prefetch = 0 : i64, scratch_operands = 0 : i64, tpu.core_type = #tpu.core_type<tc>, window_params = [{transform_indices = @transform_0, window_bounds = array<i64: 8, 128>}, {pipeline_mode = #tpu.pipeline_mode<synchronous>, transform_indices = @transform_1, window_bounds = array<i64: 128, 128>}, {pipeline_mode = #tpu.pipeline_mode<synchronous>, transform_indices = @transform_2, window_bounds = array<i64: 1, 128>}, {pipeline_mode = #tpu.pipeline_mode<synchronous>, transform_indices = @transform_3, window_bounds = array<i64: 128, 128>}, {pipeline_mode = #tpu.pipeline_mode<synchronous>, transform_indices = @transform_4, window_bounds = array<i64: 1, 128>}, {pipeline_mode = #tpu.pipeline_mode<synchronous>, transform_indices = @transform_5, window_bounds = array<i64: 128, 128>}, {pipeline_mode = #tpu.pipeline_mode<synchronous>, transform_indices = @transform_6, window_bounds = array<i64: 1, 128>}, {transform_indices = @transform_7, window_bounds = array<i64: 8, 128>}]} {
    %c0 = arith.constant 0 : index
    %c0_0 = arith.constant 0 : index
    %0 = vector.load %arg1[%c0, %c0_0] : memref<8x128xbf16, #tpu.memory_space<vmem>>, vector<8x128xbf16>
    %c0_1 = arith.constant 0 : index
    %c0_2 = arith.constant 0 : index
    %1 = vector.load %arg2[%c0_1, %c0_2] : memref<128x128xbf16, #tpu.memory_space<vmem>>, vector<128x128xbf16>
    %cst = arith.constant dense<0.000000e+00> : vector<8x128xf32>
    %2 = tpu.matmul %0, %1, %cst {dimension_numbers = #tpu.dot_dimension_numbers<[1], [0], [0], [1], [0, 0, 1, 1], [], []>} : vector<8x128xbf16>, vector<128x128xbf16>, vector<8x128xf32> -> vector<8x128xf32>
    %c0_3 = arith.constant 0 : index
    %c0_4 = arith.constant 0 : index
    %3 = vector.load %arg3[%c0_3, %c0_4] : memref<1x128xf32, #tpu.memory_space<vmem>>, vector<1x128xf32>
    %4 = vector.broadcast %3 : vector<1x128xf32> to vector<8x128xf32>
    %5 = arith.addf %2, %4 : vector<8x128xf32>
    %6 = arith.truncf %5 : vector<8x128xf32> to vector<8x128xbf16>
    %cst_5 = arith.constant 0.000000e+00 : bf16
    %7 = vector.broadcast %cst_5 : bf16 to vector<8x128xbf16>
    %8 = arith.maximumf %6, %7 : vector<8x128xbf16>
    %c0_6 = arith.constant 0 : index
    %c0_7 = arith.constant 0 : index
    %9 = vector.load %arg4[%c0_6, %c0_7] : memref<128x128xbf16, #tpu.memory_space<vmem>>, vector<128x128xbf16>
    %cst_8 = arith.constant dense<0.000000e+00> : vector<8x128xf32>
    %10 = tpu.matmul %8, %9, %cst_8 {dimension_numbers = #tpu.dot_dimension_numbers<[1], [0], [0], [1], [0, 0, 1, 1], [], []>} : vector<8x128xbf16>, vector<128x128xbf16>, vector<8x128xf32> -> vector<8x128xf32>
    %c0_9 = arith.constant 0 : index
    %c0_10 = arith.constant 0 : index
    %11 = vector.load %arg5[%c0_9, %c0_10] : memref<1x128xf32, #tpu.memory_space<vmem>>, vector<1x128xf32>
    %12 = vector.broadcast %11 : vector<1x128xf32> to vector<8x128xf32>
    %13 = arith.addf %10, %12 : vector<8x128xf32>
    %14 = arith.truncf %13 : vector<8x128xf32> to vector<8x128xbf16>
    %cst_11 = arith.constant 0.000000e+00 : bf16
    %15 = vector.broadcast %cst_11 : bf16 to vector<8x128xbf16>
    %16 = arith.maximumf %14, %15 : vector<8x128xbf16>
    %c0_12 = arith.constant 0 : index
    %c0_13 = arith.constant 0 : index
    %17 = vector.load %arg6[%c0_12, %c0_13] : memref<128x128xbf16, #tpu.memory_space<vmem>>, vector<128x128xbf16>
    %cst_14 = arith.constant dense<0.000000e+00> : vector<8x128xf32>
    %18 = tpu.matmul %16, %17, %cst_14 {dimension_numbers = #tpu.dot_dimension_numbers<[1], [0], [0], [1], [0, 0, 1, 1], [], []>} : vector<8x128xbf16>, vector<128x128xbf16>, vector<8x128xf32> -> vector<8x128xf32>
    %c0_15 = arith.constant 0 : index
    %c0_16 = arith.constant 0 : index
    %19 = vector.load %arg7[%c0_15, %c0_16] : memref<1x128xf32, #tpu.memory_space<vmem>>, vector<1x128xf32>
    %20 = vector.broadcast %19 : vector<1x128xf32> to vector<8x128xf32>
    %21 = arith.addf %18, %20 : vector<8x128xf32>
    %22 = arith.negf %21 : vector<8x128xf32>
    %23 = math.exp %22 : vector<8x128xf32>
    %cst_17 = arith.constant 1.000000e+00 : f32
    %24 = vector.broadcast %cst_17 : f32 to vector<8x128xf32>
    %25 = arith.addf %24, %23 : vector<8x128xf32>
    %26 = arith.divf %24, %25 : vector<8x128xf32>
    %c0_18 = arith.constant 0 : index
    %c0_19 = arith.constant 0 : index
    %27 = vector.load %arg8[%c0_18, %c0_19] : memref<8x128xf32, #tpu.memory_space<vmem>>, vector<8x128xf32>
    tpu.vector_store %arg8[%c0_18, %c0_19], %26 {strides = array<i32>} : memref<8x128xf32, #tpu.memory_space<vmem>>, vector<8x128xf32>,
    return
  }
  func.func @transform_0(%arg0: i32) -> (i32, i32) {
    %c0_i32 = arith.constant 0 : i32
    %c0_i32_0 = arith.constant 0 : i32
    return %arg0, %c0_i32 : i32, i32
  }
  func.func @transform_1(%arg0: i32) -> (i32, i32) {
    %c0_i32 = arith.constant 0 : i32
    %c0_i32_0 = arith.constant 0 : i32
    %c0_i32_1 = arith.constant 0 : i32
    return %c0_i32, %c0_i32_0 : i32, i32
  }
  func.func @transform_2(%arg0: i32) -> (i32, i32) {
    %c0_i32 = arith.constant 0 : i32
    %c0_i32_0 = arith.constant 0 : i32
    %c0_i32_1 = arith.constant 0 : i32
    return %c0_i32, %c0_i32_0 : i32, i32
  }
  func.func @transform_3(%arg0: i32) -> (i32, i32) {
    %c0_i32 = arith.constant 0 : i32
    %c0_i32_0 = arith.constant 0 : i32
    %c0_i32_1 = arith.constant 0 : i32
    return %c0_i32, %c0_i32_0 : i32, i32
  }
  func.func @transform_4(%arg0: i32) -> (i32, i32) {
    %c0_i32 = arith.constant 0 : i32
    %c0_i32_0 = arith.constant 0 : i32
    %c0_i32_1 = arith.constant 0 : i32
    return %c0_i32, %c0_i32_0 : i32, i32
  }
  func.func @transform_5(%arg0: i32) -> (i32, i32) {
    %c0_i32 = arith.constant 0 : i32
    %c0_i32_0 = arith.constant 0 : i32
    %c0_i32_1 = arith.constant 0 : i32
    return %c0_i32, %c0_i32_0 : i32, i32
  }
  func.func @transform_6(%arg0: i32) -> (i32, i32) {
    %c0_i32 = arith.constant 0 : i32
    %c0_i32_0 = arith.constant 0 : i32
    %c0_i32_1 = arith.constant 0 : i32
    return %c0_i32, %c0_i32_0 : i32, i32
  }
  func.func @transform_7(%arg0: i32) -> (i32, i32) {
    %c0_i32 = arith.constant 0 : i32
    %c0_i32_0 = arith.constant 0 : i32
    return %arg0, %c0_i32 : i32, i32
  }
}

</mosaic_0001>

<llo_original>
// kernel: tpu_custom_call.1
$region0: #{tpu_custom_call.1}
  #allocation0 [shape = 'u32[]', space=smem, size = 0x4, offset = 0x4, fixed_abs, tag = 'smem constant byte address 0x4 - core index']
  #allocation1 [shape = 'u32[144,128]{1,0:T(1,128)}', space=vmem, size = 0x12000, scoped, tag = 'internal scratch']
  %s0 = inlined_call_operand.hbm [shape: f32[8,128], index: 0, kind: input, shape index: {}]
  %s1 = inlined_call_operand.hbm [shape: f32[8,128], index: 1, kind: output, shape index: {}]
  %s2 = sld [smem:[#allocation0]]
  $region18: #{tpu_custom_call.1} parent=0
    _
  %s4 = ssub.s32 1, %s2
  %s5 = scalar_select 0, %s4, %s2
  $region1: #{tpu_custom_call.1} parent=0
    #allocation2 [shape = 'u8[4096]{0}', space=vmem, size = 0x1000, scoped, tag = 'input window, operand 0, single buffered']
    #allocation3 [shape = 's32[1]{0}', space=sflag, size = 0x4, scoped, tag = 'scoped memory for tpu_custom_call.1']
    #allocation4 [shape = 's32[1]{0}', space=sflag, size = 0x4, scoped, tag = 'scoped memory for tpu_custom_call.1']
    #allocation5 [shape = 'u8[4096]{0}', space=vmem, size = 0x1000, scoped, tag = 'output window, operand 0, single buffered']
    %6 = vsyncpa [#allocation3], 0
    %7 = vsyncpa [#allocation4], 0
    // Predicated region
    $region2: #{tpu_custom_call.1} parent=1 // pred_check
      _
    $region3: #{tpu_custom_call.1} parent=1 // pred_check_branch
      %9 = sbr.rel (0) target = $region5
    $region4: #{tpu_custom_call.1} parent=1 // pred_region
      %s11 = ssub.s32 128, 128
      %12 = vsyncadd [#allocation3], %s11
      %s14 = sshll.u32 [#allocation2], 4
      %s15 = int_to_ptr.vmem [resolvable:$true] %s14
      %17 = dma.hbm_to_vmem [thread:$0]  %s0, 128, %s15, [#allocation3]
    $region5: #{tpu_custom_call.1} parent=1 // pred_fallthru
      _
    // Predicated region
    $region6: #{tpu_custom_call.1} parent=1 // pred_check
      _
    $region7: #{tpu_custom_call.1} parent=1 // pred_check_branch
      %19 = sbr.rel (0) target = $region9
    $region8: #{tpu_custom_call.1} parent=1 // pred_region
      %20 = dma.done [#allocation3], 128
    $region9: #{tpu_custom_call.1} parent=1 // pred_fallthru
      _
    %v21 = vld [vmem:[#allocation2] sm:$0xff]
    %22 = vst [vmem:[#allocation5] sm:$0xff] %v21
    // Predicated region
    $region10: #{tpu_custom_call.1} parent=1 // pred_check
      _
    $region11: #{tpu_custom_call.1} parent=1 // pred_check_branch
      %24 = sbr.rel (0) target = $region13
    $region12: #{tpu_custom_call.1} parent=1 // pred_region
      %s26 = ssub.s32 128, 128
      %27 = vsyncadd [#allocation4], %s26
      %s29 = sshll.u32 [#allocation5], 4
      %s30 = int_to_ptr.vmem [resolvable:$true] %s29
      %32 = dma.vmem_to_hbm [thread:$0]  %s30, 128, %s1, [#allocation4]
    $region13: #{tpu_custom_call.1} parent=1 // pred_fallthru
      _
    // Predicated region
    $region14: #{tpu_custom_call.1} parent=1 // pred_check
      _
    $region15: #{tpu_custom_call.1} parent=1 // pred_check_branch
      %34 = sbr.rel (0) target = $region17
    $region16: #{tpu_custom_call.1} parent=1 // pred_region
      %35 = dma.done [#allocation4], 128
    $region17: #{tpu_custom_call.1} parent=1 // pred_fallthru
      _
    %36 = vsyncpa [#allocation3], 1
    %37 = vsyncpa [#allocation4], 1

// kernel: _mlp_forward_impl.1
$region0: #{_mlp_forward_impl.1}
  #allocation0 [shape = 'u32[]', space=smem, size = 0x4, offset = 0x4, fixed_abs, tag = 'smem constant byte address 0x4 - core index']
  #allocation1 [shape = 'u32[144,128]{1,0:T(1,128)}', space=vmem, size = 0x12000, scoped, tag = 'internal scratch']
  %s0 = inlined_call_operand.vmem [shape: bf16[8,128], index: 0, kind: input, shape index: {}]
  %s1 = inlined_call_operand.hbm [shape: bf16[128,128], index: 1, kind: input, shape index: {}]
  %s2 = inlined_call_operand.vmem [shape: f32[1,128], index: 2, kind: input, shape index: {}]
  %s3 = inlined_call_operand.hbm [shape: bf16[128,128], index: 3, kind: input, shape index: {}]
  %s4 = inlined_call_operand.vmem [shape: f32[1,128], index: 4, kind: input, shape index: {}]
  %s5 = inlined_call_operand.hbm [shape: bf16[128,128], index: 5, kind: input, shape index: {}]
  %s6 = inlined_call_operand.vmem [shape: f32[1,128], index: 6, kind: input, shape index: {}]
  %s7 = inlined_call_operand.hbm [shape: f32[8,128], index: 7, kind: output, shape index: {}]
  %s8 = sld [smem:[#allocation0]]
  $region50: #{_mlp_forward_impl.1} parent=0
    _
  %s10 = ssub.s32 1, %s8
  %s11 = scalar_select 0, %s10, %s8
  $region1: #{_mlp_forward_impl.1} parent=0
    #allocation2 [shape = 'u8[32768]{0}', space=vmem, size = 0x8000, scoped, tag = 'input window, operand 1, single buffered']
    #allocation3 [shape = 's32[1]{0}', space=sflag, size = 0x4, scoped, tag = 'scoped memory for _mlp_forward_impl.1']
    #allocation4 [shape = 's32[1]{0}', space=sflag, size = 0x4, scoped, tag = 'scoped memory for _mlp_forward_impl.1']
    #allocation5 [shape = 'u8[32768]{0}', space=vmem, size = 0x8000, scoped, tag = 'input window, operand 3, single buffered']
    #allocation6 [shape = 's32[1]{0}', space=sflag, size = 0x4, scoped, tag = 'scoped memory for _mlp_forward_impl.1']
    #allocation7 [shape = 'u8[32768]{0}', space=vmem, size = 0x8000, scoped, tag = 'input window, operand 5, single buffered']
    #allocation8 [shape = 'u8[4096]{0}', space=vmem, size = 0x1000, scoped, tag = 'output window, operand 0, single buffered']
    %12 = vsyncpa [#allocation3], 0
    %13 = vsyncpa [#allocation6], 0
    %14 = vsyncpa [#allocation4], 0
    // Predicated region
    $region2: #{_mlp_forward_impl.1} parent=1 // pred_check
      _
    $region3: #{_mlp_forward_impl.1} parent=1 // pred_check_branch
      %16 = sbr.rel (0) target = $region5
    $region4: #{_mlp_forward_impl.1} parent=1 // pred_region
      _
    $region5: #{_mlp_forward_impl.1} parent=1 // pred_fallthru
      _
    // Predicated region
    $region6: #{_mlp_forward_impl.1} parent=1 // pred_check
      _
    $region7: #{_mlp_forward_impl.1} parent=1 // pred_check_branch
      %18 = sbr.rel (0) target = $region9
    $region8: #{_mlp_forward_impl.1} parent=1 // pred_region
      %s20 = ssub.s32 1024, 1024
      %21 = vsyncadd [#allocation3], %s20
      %s22 = sshll.u32 [#allocation2], 4
      %s23 = int_to_ptr.vmem [resolvable:$true] %s22
      %28 = dma.hbm_to_vmem [thread:$0]  %s1, 1024, %s23, [#allocation3], 64, 64, 4
    $region9: #{_mlp_forward_impl.1} parent=1 // pred_fallthru
      _
    // Predicated region
    $region10: #{_mlp_forward_impl.1} parent=1 // pred_check
      _
    $region11: #{_mlp_forward_impl.1} parent=1 // pred_check_branch
      %30 = sbr.rel (0) target = $region13
    $region12: #{_mlp_forward_impl.1} parent=1 // pred_region
      _
    $region13: #{_mlp_forward_impl.1} parent=1 // pred_fallthru
      _
    // Predicated region
    $region14: #{_mlp_forward_impl.1} parent=1 // pred_check
      _
    $region15: #{_mlp_forward_impl.1} parent=1 // pred_check_branch
      %32 = sbr.rel (0) target = $region17
    $region16: #{_mlp_forward_impl.1} parent=1 // pred_region
      %s34 = ssub.s32 1024, 1024
      %35 = vsyncadd [#allocation6], %s34
      %s36 = sshll.u32 [#allocation5], 4
      %s37 = int_to_ptr.vmem [resolvable:$true] %s36
      %42 = dma.hbm_to_vmem [thread:$0]  %s3, 1024, %s37, [#allocation6], 64, 64, 4
    $region17: #{_mlp_forward_impl.1} parent=1 // pred_fallthru
      _
    // Predicated region
    $region18: #{_mlp_forward_impl.1} parent=1 // pred_check
      _
    $region19: #{_mlp_forward_impl.1} parent=1 // pred_check_branch
      %44 = sbr.rel (0) target = $region21
    $region20: #{_mlp_forward_impl.1} parent=1 // pred_region
      _
    $region21: #{_mlp_forward_impl.1} parent=1 // pred_fallthru
      _
    // Predicated region
    $region22: #{_mlp_forward_impl.1} parent=1 // pred_check
      _
    $region23: #{_mlp_forward_impl.1} parent=1 // pred_check_branch
      %46 = sbr.rel (0) target = $region25
    $region24: #{_mlp_forward_impl.1} parent=1 // pred_region
      %s48 = ssub.s32 1024, 1024
      %49 = vsyncadd [#allocation6], %s48
      %s50 = sshll.u32 [#allocation7], 4
      %s51 = int_to_ptr.vmem [resolvable:$true] %s50
      %56 = dma.hbm_to_vmem [thread:$0]  %s5, 1024, %s51, [#allocation6], 64, 64, 4
    $region25: #{_mlp_forward_impl.1} parent=1 // pred_fallthru
      _
    // Predicated region
    $region26: #{_mlp_forward_impl.1} parent=1 // pred_check
      _
    $region27: #{_mlp_forward_impl.1} parent=1 // pred_check_branch
      %58 = sbr.rel (0) target = $region29
    $region28: #{_mlp_forward_impl.1} parent=1 // pred_region
      _
    $region29: #{_mlp_forward_impl.1} parent=1 // pred_fallthru
      _
    // Predicated region
    $region30: #{_mlp_forward_impl.1} parent=1 // pred_check
      _
    $region31: #{_mlp_forward_impl.1} parent=1 // pred_check_branch
      %60 = sbr.rel (0) target = $region33
    $region32: #{_mlp_forward_impl.1} parent=1 // pred_region
      %61 = dma.done [#allocation3], 1024
    $region33: #{_mlp_forward_impl.1} parent=1 // pred_fallthru
      _
    // Predicated region
    $region34: #{_mlp_forward_impl.1} parent=1 // pred_check
      _
    $region35: #{_mlp_forward_impl.1} parent=1 // pred_check_branch
      %63 = sbr.rel (0) target = $region37
    $region36: #{_mlp_forward_impl.1} parent=1 // pred_region
      %64 = dma.done [#allocation6], 1024
    $region37: #{_mlp_forward_impl.1} parent=1 // pred_fallthru
      _
    // Predicated region
    $region38: #{_mlp_forward_impl.1} parent=1 // pred_check
      _
    $region39: #{_mlp_forward_impl.1} parent=1 // pred_check_branch
      %66 = sbr.rel (0) target = $region41
    $region40: #{_mlp_forward_impl.1} parent=1 // pred_region
      %67 = dma.done [#allocation6], 1024
    $region41: #{_mlp_forward_impl.1} parent=1 // pred_fallthru
      _
    %v69 = vld [vmem:[%s0] sm:$0xf]
    %v70 = vld [vmem:[#allocation2] sm:$0xf]
    %v71 = vld [vmem:[#allocation2 + $0x4] sm:$0xf]
    %v72 = vld [vmem:[#allocation2 + $0x8] sm:$0xf]
    %v73 = vld [vmem:[#allocation2 + $0xc] sm:$0xf]
    %v74 = vld [vmem:[#allocation2 + $0x10] sm:$0xf]
    %v75 = vld [vmem:[#allocation2 + $0x14] sm:$0xf]
    %v76 = vld [vmem:[#allocation2 + $0x18] sm:$0xf]
    %v77 = vld [vmem:[#allocation2 + $0x1c] sm:$0xf]
    %v78 = vld [vmem:[#allocation2 + $0x20] sm:$0xf]
    %v79 = vld [vmem:[#allocation2 + $0x24] sm:$0xf]
    %v80 = vld [vmem:[#allocation2 + $0x28] sm:$0xf]
    %v81 = vld [vmem:[#allocation2 + $0x2c] sm:$0xf]
    %v82 = vld [vmem:[#allocation2 + $0x30] sm:$0xf]
    %v83 = vld [vmem:[#allocation2 + $0x34] sm:$0xf]
    %v84 = vld [vmem:[#allocation2 + $0x38] sm:$0xf]
    %v85 = vld [vmem:[#allocation2 + $0x3c] sm:$0xf]
    %v86 = vld [vmem:[%s2] sm:$0x1]
    %v88 = vlaneseq
    %v89 = vshrl.u32 %v88, 7
    %v90 = vsub.s32 0, %v89
    %v91 = vrot.slane %v86, %v90
    %v109 = vunpack.c.l.b16 %v70
    %v110 = vunpack.c.l.b16 %v71
    %v111 = vunpack.c.l.b16 %v72
    %v112 = vunpack.c.l.b16 %v73
    %v113 = vunpack.c.l.b16 %v74
    %v114 = vunpack.c.l.b16 %v75
    %v115 = vunpack.c.l.b16 %v76
    %v116 = vunpack.c.l.b16 %v77
    %v117 = vunpack.c.l.b16 %v78
    %v118 = vunpack.c.l.b16 %v79
    %v119 = vunpack.c.l.b16 %v80
    %v120 = vunpack.c.l.b16 %v81
    %v121 = vunpack.c.l.b16 %v82
    %v122 = vunpack.c.l.b16 %v83
    %v123 = vunpack.c.l.b16 %v84
    %v124 = vunpack.c.l.b16 %v85
    %v125 = vpack.c.b16 %v110, %v109
    %v126 = vpack.c.b16 %v112, %v111
    %v127 = vpack.c.b16 %v114, %v113
    %v128 = vpack.c.b16 %v116, %v115
    %v129 = vpack.c.b16 %v118, %v117
    %v130 = vpack.c.b16 %v120, %v119
    %v131 = vpack.c.b16 %v122, %v121
    %v132 = vpack.c.b16 %v124, %v123
    %141 = vmatprep.subr.bf16.mxu0 0
    %142 = vmatpush1.bf16.msra.mxu0 %v125
    %143 = vmatprep.subr.bf16.mxu0 0
    %144 = vmatpush1.bf16.msra.mxu0 %v126
    %145 = vmatprep.subr.bf16.mxu0 0
    %146 = vmatpush1.bf16.msra.mxu0 %v127
    %147 = vmatprep.subr.bf16.mxu0 0
    %148 = vmatpush1.bf16.msra.mxu0 %v128
    %149 = vmatprep.subr.bf16.mxu0 0
    %150 = vmatpush1.bf16.msra.mxu0 %v129
    %151 = vmatprep.subr.bf16.mxu0 0
    %152 = vmatpush1.bf16.msra.mxu0 %v130
    %153 = vmatprep.subr.bf16.mxu0 0
    %154 = vmatpush1.bf16.msra.mxu0 %v131
    %155 = vmatprep.subr.bf16.mxu0 0
    %156 = vmatpush1.bf16.msra.mxu0 %v132
    %157 = vmatprep.subr.bf16.mxu0 0
    %158 = vmatpush1.bf16.msra.mxu0 0
    %159 = vmatprep.subr.bf16.mxu0 0
    %160 = vmatpush1.bf16.msra.mxu0 0
    %161 = vmatprep.subr.bf16.mxu0 0
    %162 = vmatpush1.bf16.msra.mxu0 0
    %163 = vmatprep.subr.bf16.mxu0 0
    %164 = vmatpush1.bf16.msra.mxu0 0
    %165 = vmatprep.subr.bf16.mxu0 0
    %166 = vmatpush1.bf16.msra.mxu0 0
    %167 = vmatprep.subr.bf16.mxu0 0
    %168 = vmatpush1.bf16.msra.mxu0 0
    %169 = vmatprep.subr.bf16.mxu0 0
    %170 = vmatpush1.bf16.msra.mxu0 0
    %171 = vmatprep.subr.bf16.mxu0 0
    %172 = vmatpush1.bf16.msra.mxu0 0
    %173 = vmatprep.mubr.bf16.mxu0 0
    %174 = vmatmul.mubr.bf16.gmra.mrb[0].mxu0 %v69
    %v175 = vpop.f32.mrb[0].mxu0
    %v176 = vadd.f32 %v91, %v175
    %v177 = vpop.f32.mrb[0].mxu0
    %v178 = vpop.f32.mrb[0].mxu0
    %v179 = vpop.f32.mrb[0].mxu0
    %180 = vdwg.mxu0
    %v181 = vpack.c.bf16 %v176, %v176
    %v182 = vmax.bf16 %v181, 0
    %v183 = vld [vmem:[#allocation5] sm:$0xf]
    %v184 = vld [vmem:[#allocation5 + $0x4] sm:$0xf]
    %v185 = vld [vmem:[#allocation5 + $0x8] sm:$0xf]
    %v186 = vld [vmem:[#allocation5 + $0xc] sm:$0xf]
    %v187 = vld [vmem:[#allocation5 + $0x10] sm:$0xf]
    %v188 = vld [vmem:[#allocation5 + $0x14] sm:$0xf]
    %v189 = vld [vmem:[#allocation5 + $0x18] sm:$0xf]
    %v190 = vld [vmem:[#allocation5 + $0x1c] sm:$0xf]
    %v191 = vld [vmem:[#allocation5 + $0x20] sm:$0xf]
    %v192 = vld [vmem:[#allocation5 + $0x24] sm:$0xf]
    %v193 = vld [vmem:[#allocation5 + $0x28] sm:$0xf]
    %v194 = vld [vmem:[#allocation5 + $0x2c] sm:$0xf]
    %v195 = vld [vmem:[#allocation5 + $0x30] sm:$0xf]
    %v196 = vld [vmem:[#allocation5 + $0x34] sm:$0xf]
    %v197 = vld [vmem:[#allocation5 + $0x38] sm:$0xf]
    %v198 = vld [vmem:[#allocation5 + $0x3c] sm:$0xf]
    %v199 = vld [vmem:[%s4] sm:$0x1]
    %v201 = vlaneseq
    %v202 = vshrl.u32 %v201, 7
    %v203 = vsub.s32 0, %v202
    %v204 = vrot.slane %v199, %v203
    %v222 = vunpack.c.l.b16 %v183
    %v223 = vunpack.c.l.b16 %v184
    %v224 = vunpack.c.l.b16 %v185
    %v225 = vunpack.c.l.b16 %v186
    %v226 = vunpack.c.l.b16 %v187
    %v227 = vunpack.c.l.b16 %v188
    %v228 = vunpack.c.l.b16 %v189
    %v229 = vunpack.c.l.b16 %v190
    %v230 = vunpack.c.l.b16 %v191
    %v231 = vunpack.c.l.b16 %v192
    %v232 = vunpack.c.l.b16 %v193
    %v233 = vunpack.c.l.b16 %v194
    %v234 = vunpack.c.l.b16 %v195
    %v235 = vunpack.c.l.b16 %v196
    %v236 = vunpack.c.l.b16 %v197
    %v237 = vunpack.c.l.b16 %v198
    %v238 = vpack.c.b16 %v223, %v222
    %v239 = vpack.c.b16 %v225, %v224
    %v240 = vpack.c.b16 %v227, %v226
    %v241 = vpack.c.b16 %v229, %v228
    %v242 = vpack.c.b16 %v231, %v230
    %v243 = vpack.c.b16 %v233, %v232
    %v244 = vpack.c.b16 %v235, %v234
    %v245 = vpack.c.b16 %v237, %v236
    %254 = vmatprep.subr.bf16.mxu0 0
    %255 = vmatpush1.bf16.msra.mxu0 %v238
    %256 = vmatprep.subr.bf16.mxu0 0
    %257 = vmatpush1.bf16.msra.mxu0 %v239
    %258 = vmatprep.subr.bf16.mxu0 0
    %259 = vmatpush1.bf16.msra.mxu0 %v240
    %260 = vmatprep.subr.bf16.mxu0 0
    %261 = vmatpush1.bf16.msra.mxu0 %v241
    %262 = vmatprep.subr.bf16.mxu0 0
    %263 = vmatpush1.bf16.msra.mxu0 %v242
    %264 = vmatprep.subr.bf16.mxu0 0
    %265 = vmatpush1.bf16.msra.mxu0 %v243
    %266 = vmatprep.subr.bf16.mxu0 0
    %267 = vmatpush1.bf16.msra.mxu0 %v244
    %268 = vmatprep.subr.bf16.mxu0 0
    %269 = vmatpush1.bf16.msra.mxu0 %v245
    %270 = vmatprep.subr.bf16.mxu0 0
    %271 = vmatpush1.bf16.msra.mxu0 0
    %272 = vmatprep.subr.bf16.mxu0 0
    %273 = vmatpush1.bf16.msra.mxu0 0
    %274 = vmatprep.subr.bf16.mxu0 0
    %275 = vmatpush1.bf16.msra.mxu0 0
    %276 = vmatprep.subr.bf16.mxu0 0
    %277 = vmatpush1.bf16.msra.mxu0 0
    %278 = vmatprep.subr.bf16.mxu0 0
    %279 = vmatpush1.bf16.msra.mxu0 0
    %280 = vmatprep.subr.bf16.mxu0 0
    %281 = vmatpush1.bf16.msra.mxu0 0
    %282 = vmatprep.subr.bf16.mxu0 0
    %283 = vmatpush1.bf16.msra.mxu0 0
    %284 = vmatprep.subr.bf16.mxu0 0
    %285 = vmatpush1.bf16.msra.mxu0 0
    %286 = vmatprep.mubr.bf16.mxu0 0
    %287 = vmatmul.mubr.bf16.gmra.mrb[0].mxu0 %v182
    %v288 = vpop.f32.mrb[0].mxu0
    %v289 = vadd.f32 %v204, %v288
    %v290 = vpop.f32.mrb[0].mxu0
    %v291 = vpop.f32.mrb[0].mxu0
    %v292 = vpop.f32.mrb[0].mxu0
    %293 = vdwg.mxu0
    %v294 = vpack.c.bf16 %v289, %v289
    %v295 = vmax.bf16 %v294, 0
    %v296 = vld [vmem:[#allocation7] sm:$0xf]
    %v297 = vld [vmem:[#allocation7 + $0x4] sm:$0xf]
    %v298 = vld [vmem:[#allocation7 + $0x8] sm:$0xf]
    %v299 = vld [vmem:[#allocation7 + $0xc] sm:$0xf]
    %v300 = vld [vmem:[#allocation7 + $0x10] sm:$0xf]
    %v301 = vld [vmem:[#allocation7 + $0x14] sm:$0xf]
    %v302 = vld [vmem:[#allocation7 + $0x18] sm:$0xf]
    %v303 = vld [vmem:[#allocation7 + $0x1c] sm:$0xf]
    %v304 = vld [vmem:[#allocation7 + $0x20] sm:$0xf]
    %v305 = vld [vmem:[#allocation7 + $0x24] sm:$0xf]
    %v306 = vld [vmem:[#allocation7 + $0x28] sm:$0xf]
    %v307 = vld [vmem:[#allocation7 + $0x2c] sm:$0xf]
    %v308 = vld [vmem:[#allocation7 + $0x30] sm:$0xf]
    %v309 = vld [vmem:[#allocation7 + $0x34] sm:$0xf]
    %v310 = vld [vmem:[#allocation7 + $0x38] sm:$0xf]
    %v311 = vld [vmem:[#allocation7 + $0x3c] sm:$0xf]
    %v312 = vld [vmem:[%s6] sm:$0x1]
    %v314 = vlaneseq
    %v315 = vshrl.u32 %v314, 7
    %v316 = vsub.s32 0, %v315
    %v317 = vrot.slane %v312, %v316
    %v335 = vunpack.c.l.b16 %v296
    %v336 = vunpack.c.l.b16 %v297
    %v337 = vunpack.c.l.b16 %v298
    %v338 = vunpack.c.l.b16 %v299
    %v339 = vunpack.c.l.b16 %v300
    %v340 = vunpack.c.l.b16 %v301
    %v341 = vunpack.c.l.b16 %v302
    %v342 = vunpack.c.l.b16 %v303
    %v343 = vunpack.c.l.b16 %v304
    %v344 = vunpack.c.l.b16 %v305
    %v345 = vunpack.c.l.b16 %v306
    %v346 = vunpack.c.l.b16 %v307
    %v347 = vunpack.c.l.b16 %v308
    %v348 = vunpack.c.l.b16 %v309
    %v349 = vunpack.c.l.b16 %v310
    %v350 = vunpack.c.l.b16 %v311
    %v351 = vpack.c.b16 %v336, %v335
    %v352 = vpack.c.b16 %v338, %v337
    %v353 = vpack.c.b16 %v340, %v339
    %v354 = vpack.c.b16 %v342, %v341
    %v355 = vpack.c.b16 %v344, %v343
    %v356 = vpack.c.b16 %v346, %v345
    %v357 = vpack.c.b16 %v348, %v347
    %v358 = vpack.c.b16 %v350, %v349
    %367 = vmatprep.subr.bf16.mxu0 0
    %368 = vmatpush1.bf16.msra.mxu0 %v351
    %369 = vmatprep.subr.bf16.mxu0 0
    %370 = vmatpush1.bf16.msra.mxu0 %v352
    %371 = vmatprep.subr.bf16.mxu0 0
    %372 = vmatpush1.bf16.msra.mxu0 %v353
    %373 = vmatprep.subr.bf16.mxu0 0
    %374 = vmatpush1.bf16.msra.mxu0 %v354
    %375 = vmatprep.subr.bf16.mxu0 0
    %376 = vmatpush1.bf16.msra.mxu0 %v355
    %377 = vmatprep.subr.bf16.mxu0 0
    %378 = vmatpush1.bf16.msra.mxu0 %v356
    %379 = vmatprep.subr.bf16.mxu0 0
    %380 = vmatpush1.bf16.msra.mxu0 %v357
    %381 = vmatprep.subr.bf16.mxu0 0
    %382 = vmatpush1.bf16.msra.mxu0 %v358
    %383 = vmatprep.subr.bf16.mxu0 0
    %384 = vmatpush1.bf16.msra.mxu0 0
    %385 = vmatprep.subr.bf16.mxu0 0
    %386 = vmatpush1.bf16.msra.mxu0 0
    %387 = vmatprep.subr.bf16.mxu0 0
    %388 = vmatpush1.bf16.msra.mxu0 0
    %389 = vmatprep.subr.bf16.mxu0 0
    %390 = vmatpush1.bf16.msra.mxu0 0
    %391 = vmatprep.subr.bf16.mxu0 0
    %392 = vmatpush1.bf16.msra.mxu0 0
    %393 = vmatprep.subr.bf16.mxu0 0
    %394 = vmatpush1.bf16.msra.mxu0 0
    %395 = vmatprep.subr.bf16.mxu0 0
    %396 = vmatpush1.bf16.msra.mxu0 0
    %397 = vmatprep.subr.bf16.mxu0 0
    %398 = vmatpush1.bf16.msra.mxu0 0
    %399 = vmatprep.mubr.bf16.mxu0 0
    %400 = vmatmul.mubr.bf16.gmra.mrb[0].mxu0 %v295
    %v401 = vpop.f32.mrb[0].mxu0
    %v402 = vadd.f32 %v317, %v401
    %v403 = vpop.f32.mrb[0].mxu0
    %v404 = vpop.f32.mrb[0].mxu0
    %v405 = vpop.f32.mrb[0].mxu0
    %406 = vdwg.mxu0
    %v407 = vxor.u32 %v402, 2147483648
    %v408 = vmul.f32 %v407, 1.442695
    %v409 = vpow.pop %v408
    %v410 = vadd.f32 %v409, 1.0
    %v411 = vrcp.pop %v410
    %v412 = vmul.f32 1.0, %v411
    %413 = vst [vmem:[#allocation8] sm:$0xff] %v412
    // Predicated region
    $region42: #{_mlp_forward_impl.1} parent=1 // pred_check
      _
    $region43: #{_mlp_forward_impl.1} parent=1 // pred_check_branch
      %415 = sbr.rel (0) target = $region45
    $region44: #{_mlp_forward_impl.1} parent=1 // pred_region
      %s417 = ssub.s32 128, 128
      %418 = vsyncadd [#allocation4], %s417
      %s420 = sshll.u32 [#allocation8], 4
      %s421 = int_to_ptr.vmem [resolvable:$true] %s420
      %423 = dma.vmem_to_hbm [thread:$0]  %s421, 128, %s7, [#allocation4]
    $region45: #{_mlp_forward_impl.1} parent=1 // pred_fallthru
      _
    // Predicated region
    $region46: #{_mlp_forward_impl.1} parent=1 // pred_check
      _
    $region47: #{_mlp_forward_impl.1} parent=1 // pred_check_branch
      %425 = sbr.rel (0) target = $region49
    $region48: #{_mlp_forward_impl.1} parent=1 // pred_region
      %426 = dma.done [#allocation4], 128
    $region49: #{_mlp_forward_impl.1} parent=1 // pred_fallthru
      _
    %427 = vsyncpa [#allocation3], 1
    %428 = vsyncpa [#allocation6], 1
    %429 = vsyncpa [#allocation4], 1

</llo_original>
